<compile_context>
chip_gen: v6e
topology: v6e:2x2x1
jax: 0.10.0
libtpu: 0.0.40
codegen_flags: <defaults>
</compile_context>

<pallas_src>
import functools

import jax
import jax.numpy as jnp
from jax.experimental import pallas as pl
from jax.experimental.pallas import tpu as pltpu


def lstm_cell_kernel(x_ref, h_ref, c_ref, wxh_ref, b_ref,
                     h_out_ref, c_out_ref, hbf_out_ref):
    """Single-tile LSTM cell (PyTorch gate order i, f, g, o), fused gate matmul."""
    H = h_ref.shape[-1]
    x = x_ref[...].astype(jnp.bfloat16)                       # [B, E]
    h = h_ref[...].astype(jnp.bfloat16)                       # [B, H]
    xh = jnp.concatenate([x, h], axis=-1)                     # [B, E+H]
    gates = jnp.dot(xh, wxh_ref[...],
                    preferred_element_type=jnp.float32) + b_ref[...]

    i_g = jax.nn.sigmoid(gates[:, 0 * H:1 * H])
    f_g = jax.nn.sigmoid(gates[:, 1 * H:2 * H])
    g_g = jnp.tanh(gates[:, 2 * H:3 * H])
    o_g = jax.nn.sigmoid(gates[:, 3 * H:4 * H])

    c_new = f_g * c_ref[...] + i_g * g_g
    h_new = o_g * jnp.tanh(c_new)

    c_out_ref[...] = c_new
    h_out_ref[...] = h_new
    hbf_out_ref[...] = h_new.astype(jnp.bfloat16)


def fc_proj_kernel(h_ref, wfc_ref, bfc_ref, logits_ref):
    """One lane-dense vocab tile of logits = h_new @ W_fc^T + b_fc (f32 accum)."""
    logits_ref[...] = (
        jnp.dot(h_ref[...], wfc_ref[...], preferred_element_type=jnp.float32)
        + bfc_ref[...])


@functools.partial(jax.jit, static_argnames=("tv",))
def decoder_forward(tokens, hidden, cell, params, *, tv=2048):
    """tokens: [B] int; hidden/cell: [num_layers=1, B, H]. Returns (logits, hidden, cell)."""
    B = tokens.shape[0]
    V, E = params["emb"].shape
    H = hidden.shape[-1]

    B_pad = ((B + 7) // 8) * 8                      # full sublane tiles

    # Vocab tile: large (>=2048) so the projection is HBM-bandwidth bound, not
    # per-grid-step-overhead bound; clamped + 128-aligned for small vocabs.
    V_128 = ((V + 127) // 128) * 128
    tv = max(128, ((min(tv, V_128) + 127) // 128) * 128)
    nv = pl.cdiv(V, tv)
    V_pad = nv * tv

    # ---- Embedding gather in plain XLA (hoisted out of the kernels). ----
    x = params["emb"][tokens.astype(jnp.int32)]                          # [B, E]
    x = jnp.zeros((B_pad, E), jnp.float32).at[:B].set(x)
    h0 = jnp.zeros((B_pad, H), jnp.float32).at[:B].set(hidden[0].astype(jnp.float32))
    c0 = jnp.zeros((B_pad, H), jnp.float32).at[:B].set(cell[0].astype(jnp.float32))

    # ---- LSTM cell: tiny, fully VMEM-resident Pallas kernel. ----
    h1, c1, h_bf = pl.pallas_call(
        lstm_cell_kernel,
        out_shape=(
            jax.ShapeDtypeStruct((B_pad, H), jnp.float32),
            jax.ShapeDtypeStruct((B_pad, H), jnp.float32),
            jax.ShapeDtypeStruct((B_pad, H), jnp.bfloat16),
        ),
        grid=(1,),
        in_specs=[
            pl.BlockSpec((B_pad, E), lambda i: (0, 0)),
            pl.BlockSpec((B_pad, H), lambda i: (0, 0)),
            pl.BlockSpec((B_pad, H), lambda i: (0, 0)),
            pl.BlockSpec((E + H, 4 * H), lambda i: (0, 0)),
            pl.BlockSpec((1, 4 * H), lambda i: (0, 0)),
        ],
        out_specs=(
            pl.BlockSpec((B_pad, H), lambda i: (0, 0)),
            pl.BlockSpec((B_pad, H), lambda i: (0, 0)),
            pl.BlockSpec((B_pad, H), lambda i: (0, 0)),
        ),
    )(x, h0, c0, params["wxh_t"], params["b"])

    # ---- Output projection: stream W_fc^T tiles from HBM (bf16, f32 accum). ----
    wfc = params["wfc_t"]
    bfc = params["bfc"]
    if V_pad != V:
        wfc = jnp.pad(wfc, ((0, 0), (0, V_pad - V)))
        bfc = jnp.pad(bfc, ((0, 0), (0, V_pad - V)))

    # VMEM budget: double-buffered W tile + logits tile + bias + resident h, plus headroom.
    vmem_bytes = (2 * H * tv * 2 + 2 * B_pad * tv * 4 + 2 * tv * 4
                  + B_pad * H * 2 + (4 << 20))
    vmem_bytes = int(min(max(vmem_bytes, 16 << 20), 48 << 20))

    logits = pl.pallas_call(
        fc_proj_kernel,
        out_shape=jax.ShapeDtypeStruct((B_pad, V_pad), jnp.float32),
        grid=(nv,),
        in_specs=[
            pl.BlockSpec((B_pad, H), lambda j: (0, 0)),       # h_new (resident)
            pl.BlockSpec((H, tv), lambda j: (0, j)),          # W_fc^T tile (streamed)
            pl.BlockSpec((1, tv), lambda j: (0, j)),          # b_fc tile
        ],
        out_specs=pl.BlockSpec((B_pad, tv), lambda j: (0, j)),
        compiler_params=pltpu.CompilerParams(
            dimension_semantics=("parallel",),                # v7x: shard vocab tiles over both TCs
            vmem_limit_bytes=vmem_bytes),
    )(h_bf, wfc, bfc)

    return logits[:B, :V], h1[None, :B, :], c1[None, :B, :]


def init_params(key, output_dim, embedding_dim, hidden_dim):
    """Deterministic parameter init matching PyTorch shapes (num_layers=1)."""
    ks = jax.random.split(key, 7)
    bound = 1.0 / jnp.sqrt(hidden_dim)
    emb = jax.random.normal(ks[0], (output_dim, embedding_dim), jnp.float32)
    w_ih = jax.random.uniform(ks[1], (4 * hidden_dim, embedding_dim),
                              jnp.float32, -bound, bound)
    w_hh = jax.random.uniform(ks[2], (4 * hidden_dim, hidden_dim),
                              jnp.float32, -bound, bound)
    b_ih = jax.random.uniform(ks[3], (4 * hidden_dim,), jnp.float32, -bound, bound)
    b_hh = jax.random.uniform(ks[4], (4 * hidden_dim,), jnp.float32, -bound, bound)
    w_fc = jax.random.uniform(ks[5], (output_dim, hidden_dim),
                              jnp.float32, -bound, bound)
    b_fc = jax.random.uniform(ks[6], (output_dim,), jnp.float32, -bound, bound)
    # Fused LSTM weight [W_ih ; W_hh]^T -> [E+H, 4H], bf16 for the MXU.
    wxh_t = jnp.concatenate([w_ih, w_hh], axis=1).T.astype(jnp.bfloat16)
    return {
        "emb": emb,                                    # [V, E]   f32
        "wxh_t": wxh_t,                                # [E+H,4H] bf16 fused gate weight
        "b": (b_ih + b_hh).reshape(1, -1),             # [1, 4H]  f32
        "wfc_t": w_fc.T.astype(jnp.bfloat16),          # [H, V]   bf16 (streamed tiles)
        "bfc": b_fc.reshape(1, -1),                    # [1, V]   f32
    }


def decoder_forward_ref(tokens, hidden, cell, params):
    """Pure-JAX reference mirroring the kernels' numerics (bf16 weights, f32 accum)."""
    H = hidden.shape[-1]
    x = params["emb"][tokens].astype(jnp.bfloat16)                    # [B, E]
    h = hidden[0].astype(jnp.bfloat16)                                # [B, H]
    xh = jnp.concatenate([x, h], axis=-1)                             # [B, E+H] bf16
    gates = jnp.dot(xh, params["wxh_t"],
                    preferred_element_type=jnp.float32) + params["b"]
    i = jax.nn.sigmoid(gates[:, 0 * H:1 * H])
    f = jax.nn.sigmoid(gates[:, 1 * H:2 * H])
    g = jnp.tanh(gates[:, 2 * H:3 * H])
    o = jax.nn.sigmoid(gates[:, 3 * H:4 * H])
    c_new = f * cell[0] + i * g
    h_new = o * jnp.tanh(c_new)
    logits = (jnp.dot(h_new.astype(jnp.bfloat16), params["wfc_t"],
                      preferred_element_type=jnp.float32) + params["bfc"])
    return logits, h_new[None], c_new[None]


if __name__ == "__main__":
    # Small, lane/sublane-friendly shapes consistent with the module.
    output_dim = 512      # target vocab size
    embedding_dim = 128
    hidden_dim = 128      # lane-aligned gate slices
    num_layers = 1        # dropout inactive for num_layers == 1
    batch = 4             # padded to 8 sublanes inside the wrapper

    key = jax.random.PRNGKey(0)
    k_par, k_tok, k_h, k_c = jax.random.split(key, 4)

    params = init_params(k_par, output_dim, embedding_dim, hidden_dim)
    tokens = jax.random.randint(k_tok, (batch,), 0, output_dim, dtype=jnp.int32)
    hidden = jax.random.normal(k_h, (num_layers, batch, hidden_dim), jnp.float32)
    cell = jax.random.normal(k_c, (num_layers, batch, hidden_dim), jnp.float32)

    logits, h_new, c_new = decoder_forward(tokens, hidden, cell, params)
    jax.block_until_ready((logits, h_new, c_new))

    # Verify against pure-JAX reference.
    logits_r, h_r, c_r = decoder_forward_ref(tokens, hidden, cell, params)
    assert logits.shape == (batch, output_dim)
    assert h_new.shape == (num_layers, batch, hidden_dim)
    assert c_new.shape == (num_layers, batch, hidden_dim)
    assert jnp.allclose(logits, logits_r, atol=5e-3, rtol=5e-3)
    assert jnp.allclose(h_new, h_r, atol=5e-3, rtol=5e-3)
    assert jnp.allclose(c_new, c_r, atol=5e-3, rtol=5e-3)

    print("KERNEL_OK")
</pallas_src>

<mosaic_0001>
module attributes {stable_mosaic.version = 11 : i64} {
  func.func @lstm_cell_kernel(%arg0: i32, %arg1: memref<8x128xf32, #tpu.memory_space<vmem>>, %arg2: memref<8x128xf32, #tpu.memory_space<vmem>>, %arg3: memref<8x128xf32, #tpu.memory_space<vmem>>, %arg4: memref<256x512xbf16, #tpu.memory_space<vmem>>, %arg5: memref<1x512xf32, #tpu.memory_space<vmem>>, %arg6: memref<8x128xf32, #tpu.memory_space<vmem>>, %arg7: memref<8x128xf32, #tpu.memory_space<vmem>>, %arg8: memref<8x128xbf16, #tpu.memory_space<vmem>>) attributes {dimension_semantics = [#tpu.dimension_semantics<arbitrary>], iteration_bounds = array<i64: 1>, scalar_prefetch = 0 : i64, scratch_operands = 0 : i64, tpu.core_type = #tpu.core_type<tc>, window_params = [{pipeline_mode = #tpu.pipeline_mode<synchronous>, transform_indices = @transform_0, window_bounds = array<i64: 8, 128>}, {pipeline_mode = #tpu.pipeline_mode<synchronous>, transform_indices = @transform_1, window_bounds = array<i64: 8, 128>}, {pipeline_mode = #tpu.pipeline_mode<synchronous>, transform_indices = @transform_2, window_bounds = array<i64: 8, 128>}, {pipeline_mode = #tpu.pipeline_mode<synchronous>, transform_indices = @transform_3, window_bounds = array<i64: 256, 512>}, {pipeline_mode = #tpu.pipeline_mode<synchronous>, transform_indices = @transform_4, window_bounds = array<i64: 1, 512>}, {pipeline_mode = #tpu.pipeline_mode<synchronous>, transform_indices = @transform_5, window_bounds = array<i64: 8, 128>}, {pipeline_mode = #tpu.pipeline_mode<synchronous>, transform_indices = @transform_6, window_bounds = array<i64: 8, 128>}, {pipeline_mode = #tpu.pipeline_mode<synchronous>, transform_indices = @transform_7, window_bounds = array<i64: 8, 128>}]} {
    %c0 = arith.constant 0 : index
    %c0_0 = arith.constant 0 : index
    %0 = vector.load %arg1[%c0, %c0_0] : memref<8x128xf32, #tpu.memory_space<vmem>>, vector<8x128xf32>
    %1 = arith.truncf %0 : vector<8x128xf32> to vector<8x128xbf16>
    %c0_1 = arith.constant 0 : index
    %c0_2 = arith.constant 0 : index
    %2 = vector.load %arg2[%c0_1, %c0_2] : memref<8x128xf32, #tpu.memory_space<vmem>>, vector<8x128xf32>
    %3 = arith.truncf %2 : vector<8x128xf32> to vector<8x128xbf16>
    %4 = tpu.concatenate %1, %3 in 1 : vector<8x128xbf16>, vector<8x128xbf16> -> vector<8x256xbf16>
    %c0_3 = arith.constant 0 : index
    %c0_4 = arith.constant 0 : index
    %5 = vector.load %arg4[%c0_3, %c0_4] : memref<256x512xbf16, #tpu.memory_space<vmem>>, vector<256x512xbf16>
    %cst = arith.constant dense<0.000000e+00> : vector<8x512xf32>
    %6 = tpu.matmul %4, %5, %cst {dimension_numbers = #tpu.dot_dimension_numbers<[1], [0], [0], [1], [0, 0, 1, 1], [], []>} : vector<8x256xbf16>, vector<256x512xbf16>, vector<8x512xf32> -> vector<8x512xf32>
    %c0_5 = arith.constant 0 : index
    %c0_6 = arith.constant 0 : index
    %7 = vector.load %arg5[%c0_5, %c0_6] : memref<1x512xf32, #tpu.memory_space<vmem>>, vector<1x512xf32>
    %8 = vector.broadcast %7 : vector<1x512xf32> to vector<8x512xf32>
    %9 = arith.addf %6, %8 : vector<8x512xf32>
    %10 = vector.extract_strided_slice %9 {offsets = [0, 0], sizes = [8, 128], strides = [1, 1]} : vector<8x512xf32> to vector<8x128xf32>
    %11 = arith.negf %10 : vector<8x128xf32>
    %12 = math.exp %11 : vector<8x128xf32>
    %cst_7 = arith.constant 1.000000e+00 : f32
    %13 = vector.broadcast %cst_7 : f32 to vector<8x128xf32>
    %14 = arith.addf %13, %12 : vector<8x128xf32>
    %15 = arith.divf %13, %14 : vector<8x128xf32>
    %16 = vector.extract_strided_slice %9 {offsets = [0, 128], sizes = [8, 128], strides = [1, 1]} : vector<8x512xf32> to vector<8x128xf32>
    %17 = arith.negf %16 : vector<8x128xf32>
    %18 = math.exp %17 : vector<8x128xf32>
    %cst_8 = arith.constant 1.000000e+00 : f32
    %19 = vector.broadcast %cst_8 : f32 to vector<8x128xf32>
    %20 = arith.addf %19, %18 : vector<8x128xf32>
    %21 = arith.divf %19, %20 : vector<8x128xf32>
    %22 = vector.extract_strided_slice %9 {offsets = [0, 256], sizes = [8, 128], strides = [1, 1]} : vector<8x512xf32> to vector<8x128xf32>
    %23 = math.tanh %22 : vector<8x128xf32>
    %24 = vector.extract_strided_slice %9 {offsets = [0, 384], sizes = [8, 128], strides = [1, 1]} : vector<8x512xf32> to vector<8x128xf32>
    %25 = arith.negf %24 : vector<8x128xf32>
    %26 = math.exp %25 : vector<8x128xf32>
    %cst_9 = arith.constant 1.000000e+00 : f32
    %27 = vector.broadcast %cst_9 : f32 to vector<8x128xf32>
    %28 = arith.addf %27, %26 : vector<8x128xf32>
    %29 = arith.divf %27, %28 : vector<8x128xf32>
    %c0_10 = arith.constant 0 : index
    %c0_11 = arith.constant 0 : index
    %30 = vector.load %arg3[%c0_10, %c0_11] : memref<8x128xf32, #tpu.memory_space<vmem>>, vector<8x128xf32>
    %31 = arith.mulf %21, %30 : vector<8x128xf32>
    %32 = arith.mulf %15, %23 : vector<8x128xf32>
    %33 = arith.addf %31, %32 : vector<8x128xf32>
    %34 = math.tanh %33 : vector<8x128xf32>
    %35 = arith.mulf %29, %34 : vector<8x128xf32>
    %c0_12 = arith.constant 0 : index
    %c0_13 = arith.constant 0 : index
    %36 = vector.load %arg7[%c0_12, %c0_13] : memref<8x128xf32, #tpu.memory_space<vmem>>, vector<8x128xf32>
    tpu.vector_store %arg7[%c0_12, %c0_13], %33 {strides = array<i32>} : memref<8x128xf32, #tpu.memory_space<vmem>>, vector<8x128xf32>,
    %c0_14 = arith.constant 0 : index
    %c0_15 = arith.constant 0 : index
    %37 = vector.load %arg6[%c0_14, %c0_15] : memref<8x128xf32, #tpu.memory_space<vmem>>, vector<8x128xf32>
    tpu.vector_store %arg6[%c0_14, %c0_15], %35 {strides = array<i32>} : memref<8x128xf32, #tpu.memory_space<vmem>>, vector<8x128xf32>,
    %38 = arith.truncf %35 : vector<8x128xf32> to vector<8x128xbf16>
    %c0_16 = arith.constant 0 : index
    %c0_17 = arith.constant 0 : index
    %39 = vector.load %arg8[%c0_16, %c0_17] : memref<8x128xbf16, #tpu.memory_space<vmem>>, vector<8x128xbf16>
    tpu.vector_store %arg8[%c0_16, %c0_17], %38 {strides = array<i32>} : memref<8x128xbf16, #tpu.memory_space<vmem>>, vector<8x128xbf16>,
    return
  }
  func.func @transform_0(%arg0: i32) -> (i32, i32) {
    %c0_i32 = arith.constant 0 : i32
    %c0_i32_0 = arith.constant 0 : i32
    %c0_i32_1 = arith.constant 0 : i32
    return %c0_i32, %c0_i32_0 : i32, i32
  }
  func.func @transform_1(%arg0: i32) -> (i32, i32) {
    %c0_i32 = arith.constant 0 : i32
    %c0_i32_0 = arith.constant 0 : i32
    %c0_i32_1 = arith.constant 0 : i32
    return %c0_i32, %c0_i32_0 : i32, i32
  }
  func.func @transform_2(%arg0: i32) -> (i32, i32) {
    %c0_i32 = arith.constant 0 : i32
    %c0_i32_0 = arith.constant 0 : i32
    %c0_i32_1 = arith.constant 0 : i32
    return %c0_i32, %c0_i32_0 : i32, i32
  }
  func.func @transform_3(%arg0: i32) -> (i32, i32) {
    %c0_i32 = arith.constant 0 : i32
    %c0_i32_0 = arith.constant 0 : i32
    %c0_i32_1 = arith.constant 0 : i32
    return %c0_i32, %c0_i32_0 : i32, i32
  }
  func.func @transform_4(%arg0: i32) -> (i32, i32) {
    %c0_i32 = arith.constant 0 : i32
    %c0_i32_0 = arith.constant 0 : i32
    %c0_i32_1 = arith.constant 0 : i32
    return %c0_i32, %c0_i32_0 : i32, i32
  }
  func.func @transform_5(%arg0: i32) -> (i32, i32) {
    %c0_i32 = arith.constant 0 : i32
    %c0_i32_0 = arith.constant 0 : i32
    %c0_i32_1 = arith.constant 0 : i32
    return %c0_i32, %c0_i32_0 : i32, i32
  }
  func.func @transform_6(%arg0: i32) -> (i32, i32) {
    %c0_i32 = arith.constant 0 : i32
    %c0_i32_0 = arith.constant 0 : i32
    %c0_i32_1 = arith.constant 0 : i32
    return %c0_i32, %c0_i32_0 : i32, i32
  }
  func.func @transform_7(%arg0: i32) -> (i32, i32) {
    %c0_i32 = arith.constant 0 : i32
    %c0_i32_0 = arith.constant 0 : i32
    %c0_i32_1 = arith.constant 0 : i32
    return %c0_i32, %c0_i32_0 : i32, i32
  }
}

module attributes {stable_mosaic.version = 11 : i64} {
  func.func @fc_proj_kernel(%arg0: i32, %arg1: memref<8x128xbf16, #tpu.memory_space<vmem>>, %arg2: memref<128x512xbf16, #tpu.memory_space<vmem>>, %arg3: memref<1x512xf32, #tpu.memory_space<vmem>>, %arg4: memref<8x512xf32, #tpu.memory_space<vmem>>) attributes {dimension_semantics = [#tpu.dimension_semantics<parallel>], iteration_bounds = array<i64: 1>, scalar_prefetch = 0 : i64, scratch_operands = 0 : i64, tpu.core_type = #tpu.core_type<tc>, window_params = [{pipeline_mode = #tpu.pipeline_mode<synchronous>, transform_indices = @transform_0, window_bounds = array<i64: 8, 128>}, {transform_indices = @transform_1, window_bounds = array<i64: 128, 512>}, {transform_indices = @transform_2, window_bounds = array<i64: 1, 512>}, {transform_indices = @transform_3, window_bounds = array<i64: 8, 512>}]} {
    %c0 = arith.constant 0 : index
    %c0_0 = arith.constant 0 : index
    %0 = vector.load %arg1[%c0, %c0_0] : memref<8x128xbf16, #tpu.memory_space<vmem>>, vector<8x128xbf16>
    %c0_1 = arith.constant 0 : index
    %c0_2 = arith.constant 0 : index
    %1 = vector.load %arg2[%c0_1, %c0_2] : memref<128x512xbf16, #tpu.memory_space<vmem>>, vector<128x512xbf16>
    %cst = arith.constant dense<0.000000e+00> : vector<8x512xf32>
    %2 = tpu.matmul %0, %1, %cst {dimension_numbers = #tpu.dot_dimension_numbers<[1], [0], [0], [1], [0, 0, 1, 1], [], []>} : vector<8x128xbf16>, vector<128x512xbf16>, vector<8x512xf32> -> vector<8x512xf32>
    %c0_3 = arith.constant 0 : index
    %c0_4 = arith.constant 0 : index
    %3 = vector.load %arg3[%c0_3, %c0_4] : memref<1x512xf32, #tpu.memory_space<vmem>>, vector<1x512xf32>
    %4 = vector.broadcast %3 : vector<1x512xf32> to vector<8x512xf32>
    %5 = arith.addf %2, %4 : vector<8x512xf32>
    %c0_5 = arith.constant 0 : index
    %c0_6 = arith.constant 0 : index
    %6 = vector.load %arg4[%c0_5, %c0_6] : memref<8x512xf32, #tpu.memory_space<vmem>>, vector<8x512xf32>
    tpu.vector_store %arg4[%c0_5, %c0_6], %5 {strides = array<i32>} : memref<8x512xf32, #tpu.memory_space<vmem>>, vector<8x512xf32>,
    return
  }
  func.func @transform_0(%arg0: i32) -> (i32, i32) {
    %c0_i32 = arith.constant 0 : i32
    %c0_i32_0 = arith.constant 0 : i32
    %c0_i32_1 = arith.constant 0 : i32
    return %c0_i32, %c0_i32_0 : i32, i32
  }
  func.func @transform_1(%arg0: i32) -> (i32, i32) {
    %c0_i32 = arith.constant 0 : i32
    %c0_i32_0 = arith.constant 0 : i32
    return %c0_i32, %arg0 : i32, i32
  }
  func.func @transform_2(%arg0: i32) -> (i32, i32) {
    %c0_i32 = arith.constant 0 : i32
    %c0_i32_0 = arith.constant 0 : i32
    return %c0_i32, %arg0 : i32, i32
  }
  func.func @transform_3(%arg0: i32) -> (i32, i32) {
    %c0_i32 = arith.constant 0 : i32
    %c0_i32_0 = arith.constant 0 : i32
    return %c0_i32, %arg0 : i32, i32
  }
}

</mosaic_0001>

<llo_original>
// kernel: decoder_forward.2
$region0: #{decoder_forward.2}
  #allocation0 [shape = 'u32[]', space=smem, size = 0x4, offset = 0x4, fixed_abs, tag = 'smem constant byte address 0x4 - core index']
  #allocation1 [shape = 'u32[144,128]{1,0:T(1,128)}', space=vmem, size = 0x12000, scoped, tag = 'internal scratch']
  %s0 = inlined_call_operand.vmem [shape: f32[8,128], index: 0, kind: input, shape index: {}]
  %s1 = inlined_call_operand.vmem [shape: f32[8,128], index: 1, kind: input, shape index: {}]
  %s2 = inlined_call_operand.vmem [shape: f32[8,128], index: 2, kind: input, shape index: {}]
  %s3 = inlined_call_operand.hbm [shape: bf16[256,512], index: 3, kind: input, shape index: {}]
  %s4 = inlined_call_operand.vmem [shape: f32[1,512], index: 4, kind: input, shape index: {}]
  %s5 = inlined_call_operand.vmem [shape: f32[8,128], index: 5, kind: output, shape index: {0}]
  %s6 = inlined_call_operand.vmem [shape: f32[8,128], index: 6, kind: output, shape index: {1}]
  %s7 = inlined_call_operand.vmem [shape: bf16[8,128], index: 7, kind: output, shape index: {2}]
  %8 = xla_tuple %s5, %s6, %s7
  %s9 = sld [smem:[#allocation0]]
  $region50: #{decoder_forward.2} parent=0
    _
  %s11 = ssub.s32 1, %s9
  %s12 = scalar_select 0, %s11, %s9
  $region1: #{decoder_forward.2} parent=0
    #allocation2 [shape = 'u8[262144]{0}', space=vmem, size = 0x40000, scoped, tag = 'input window, operand 3, single buffered']
    #allocation3 [shape = 's32[1]{0}', space=sflag, size = 0x4, scoped, tag = 'scoped memory for decoder_forward.2']
    %13 = vsyncpa [#allocation3], 0
    // Predicated region
    $region2: #{decoder_forward.2} parent=1 // pred_check
      _
    $region3: #{decoder_forward.2} parent=1 // pred_check_branch
      %15 = sbr.rel (0) target = $region5
    $region4: #{decoder_forward.2} parent=1 // pred_region
      _
    $region5: #{decoder_forward.2} parent=1 // pred_fallthru
      _
    // Predicated region
    $region6: #{decoder_forward.2} parent=1 // pred_check
      _
    $region7: #{decoder_forward.2} parent=1 // pred_check_branch
      %17 = sbr.rel (0) target = $region9
    $region8: #{decoder_forward.2} parent=1 // pred_region
      _
    $region9: #{decoder_forward.2} parent=1 // pred_fallthru
      _
    // Predicated region
    $region10: #{decoder_forward.2} parent=1 // pred_check
      _
    $region11: #{decoder_forward.2} parent=1 // pred_check_branch
      %19 = sbr.rel (0) target = $region13
    $region12: #{decoder_forward.2} parent=1 // pred_region
      _
    $region13: #{decoder_forward.2} parent=1 // pred_fallthru
      _
    // Predicated region
    $region14: #{decoder_forward.2} parent=1 // pred_check
      _
    $region15: #{decoder_forward.2} parent=1 // pred_check_branch
      %21 = sbr.rel (0) target = $region17
    $region16: #{decoder_forward.2} parent=1 // pred_region
      %s23 = ssub.s32 8192, 8192
      %24 = vsyncadd [#allocation3], %s23
      %s25 = sshll.u32 [#allocation2], 4
      %s26 = int_to_ptr.vmem [resolvable:$true] %s25
      %31 = dma.hbm_to_vmem [thread:$0]  %s3, 8192, %s26, [#allocation3], 256, 256, 16
    $region17: #{decoder_forward.2} parent=1 // pred_fallthru
      _
    // Predicated region
    $region18: #{decoder_forward.2} parent=1 // pred_check
      _
    $region19: #{decoder_forward.2} parent=1 // pred_check_branch
      %33 = sbr.rel (0) target = $region21
    $region20: #{decoder_forward.2} parent=1 // pred_region
      _
    $region21: #{decoder_forward.2} parent=1 // pred_fallthru
      _
    // Predicated region
    $region22: #{decoder_forward.2} parent=1 // pred_check
      _
    $region23: #{decoder_forward.2} parent=1 // pred_check_branch
      %35 = sbr.rel (0) target = $region25
    $region24: #{decoder_forward.2} parent=1 // pred_region
      %36 = dma.done [#allocation3], 8192
    $region25: #{decoder_forward.2} parent=1 // pred_fallthru
      _
    %v37 = vld [vmem:[%s0] sm:$0xff]
    %v38 = vpack.c.bf16 %v37, %v37
    %v39 = vld [vmem:[%s1] sm:$0xff]
    %v40 = vpack.c.bf16 %v39, %v39
    %v41 = vld [vmem:[#allocation2] sm:$0xff]
    %v42 = vld [vmem:[#allocation2 + $0x8] sm:$0xff]
    %v43 = vld [vmem:[#allocation2 + $0x10] sm:$0xff]
    %v44 = vld [vmem:[#allocation2 + $0x18] sm:$0xff]
    %v45 = vld [vmem:[#allocation2 + $0x20] sm:$0xff]
    %v46 = vld [vmem:[#allocation2 + $0x28] sm:$0xff]
    %v47 = vld [vmem:[#allocation2 + $0x30] sm:$0xff]
    %v48 = vld [vmem:[#allocation2 + $0x38] sm:$0xff]
    %v49 = vld [vmem:[#allocation2 + $0x40] sm:$0xff]
    %v50 = vld [vmem:[#allocation2 + $0x48] sm:$0xff]
    %v51 = vld [vmem:[#allocation2 + $0x50] sm:$0xff]
    %v52 = vld [vmem:[#allocation2 + $0x58] sm:$0xff]
    %v53 = vld [vmem:[#allocation2 + $0x60] sm:$0xff]
    %v54 = vld [vmem:[#allocation2 + $0x68] sm:$0xff]
    %v55 = vld [vmem:[#allocation2 + $0x70] sm:$0xff]
    %v56 = vld [vmem:[#allocation2 + $0x78] sm:$0xff]
    %v57 = vld [vmem:[#allocation2 + $0x80] sm:$0xff]
    %v58 = vld [vmem:[#allocation2 + $0x88] sm:$0xff]
    %v59 = vld [vmem:[#allocation2 + $0x90] sm:$0xff]
    %v60 = vld [vmem:[#allocation2 + $0x98] sm:$0xff]
    %v61 = vld [vmem:[#allocation2 + $0xa0] sm:$0xff]
    %v62 = vld [vmem:[#allocation2 + $0xa8] sm:$0xff]
    %v63 = vld [vmem:[#allocation2 + $0xb0] sm:$0xff]
    %v64 = vld [vmem:[#allocation2 + $0xb8] sm:$0xff]
    %v65 = vld [vmem:[#allocation2 + $0xc0] sm:$0xff]
    %v66 = vld [vmem:[#allocation2 + $0xc8] sm:$0xff]
    %v67 = vld [vmem:[#allocation2 + $0xd0] sm:$0xff]
    %v68 = vld [vmem:[#allocation2 + $0xd8] sm:$0xff]
    %v69 = vld [vmem:[#allocation2 + $0xe0] sm:$0xff]
    %v70 = vld [vmem:[#allocation2 + $0xe8] sm:$0xff]
    %v71 = vld [vmem:[#allocation2 + $0xf0] sm:$0xff]
    %v72 = vld [vmem:[#allocation2 + $0xf8] sm:$0xff]
    %v73 = vld [vmem:[#allocation2 + $0x100] sm:$0xff]
    %v74 = vld [vmem:[#allocation2 + $0x108] sm:$0xff]
    %v75 = vld [vmem:[#allocation2 + $0x110] sm:$0xff]
    %v76 = vld [vmem:[#allocation2 + $0x118] sm:$0xff]
    %v77 = vld [vmem:[#allocation2 + $0x120] sm:$0xff]
    %v78 = vld [vmem:[#allocation2 + $0x128] sm:$0xff]
    %v79 = vld [vmem:[#allocation2 + $0x130] sm:$0xff]
    %v80 = vld [vmem:[#allocation2 + $0x138] sm:$0xff]
    %v81 = vld [vmem:[#allocation2 + $0x140] sm:$0xff]
    %v82 = vld [vmem:[#allocation2 + $0x148] sm:$0xff]
    %v83 = vld [vmem:[#allocation2 + $0x150] sm:$0xff]
    %v84 = vld [vmem:[#allocation2 + $0x158] sm:$0xff]
    %v85 = vld [vmem:[#allocation2 + $0x160] sm:$0xff]
    %v86 = vld [vmem:[#allocation2 + $0x168] sm:$0xff]
    %v87 = vld [vmem:[#allocation2 + $0x170] sm:$0xff]
    %v88 = vld [vmem:[#allocation2 + $0x178] sm:$0xff]
    %v89 = vld [vmem:[#allocation2 + $0x180] sm:$0xff]
    %v90 = vld [vmem:[#allocation2 + $0x188] sm:$0xff]
    %v91 = vld [vmem:[#allocation2 + $0x190] sm:$0xff]
    %v92 = vld [vmem:[#allocation2 + $0x198] sm:$0xff]
    %v93 = vld [vmem:[#allocation2 + $0x1a0] sm:$0xff]
    %v94 = vld [vmem:[#allocation2 + $0x1a8] sm:$0xff]
    %v95 = vld [vmem:[#allocation2 + $0x1b0] sm:$0xff]
    %v96 = vld [vmem:[#allocation2 + $0x1b8] sm:$0xff]
    %v97 = vld [vmem:[#allocation2 + $0x1c0] sm:$0xff]
    %v98 = vld [vmem:[#allocation2 + $0x1c8] sm:$0xff]
    %v99 = vld [vmem:[#allocation2 + $0x1d0] sm:$0xff]
    %v100 = vld [vmem:[#allocation2 + $0x1d8] sm:$0xff]
    %v101 = vld [vmem:[#allocation2 + $0x1e0] sm:$0xff]
    %v102 = vld [vmem:[#allocation2 + $0x1e8] sm:$0xff]
    %v103 = vld [vmem:[#allocation2 + $0x1f0] sm:$0xff]
    %v104 = vld [vmem:[#allocation2 + $0x1f8] sm:$0xff]
    %v105 = vld [vmem:[%s4] sm:$0xf]
    %v107 = vlaneseq
    %v108 = vshrl.u32 %v107, 7
    %v109 = vsub.s32 0, %v108
    %v110 = vrot.slane %v105, %v109
    %v111 = vlaneseq
    %v112 = vshrl.u32 %v111, 7
    %v113 = vsub.s32 1, %v112
    %v114 = vrot.slane %v105, %v113
    %v115 = vlaneseq
    %v116 = vshrl.u32 %v115, 7
    %v117 = vsub.s32 2, %v116
    %v118 = vrot.slane %v105, %v117
    %v119 = vlaneseq
    %v120 = vshrl.u32 %v119, 7
    %v121 = vsub.s32 3, %v120
    %v122 = vrot.slane %v105, %v121
    %v191 = vunpack.c.l.b16 %v41
    %v192 = vunpack.c.h.b16 %v41
    %v193 = vunpack.c.l.b16 %v42
    %v194 = vunpack.c.h.b16 %v42
    %v195 = vunpack.c.l.b16 %v43
    %v196 = vunpack.c.h.b16 %v43
    %v197 = vunpack.c.l.b16 %v44
    %v198 = vunpack.c.h.b16 %v44
    %v199 = vunpack.c.l.b16 %v45
    %v200 = vunpack.c.h.b16 %v45
    %v201 = vunpack.c.l.b16 %v46
    %v202 = vunpack.c.h.b16 %v46
    %v203 = vunpack.c.l.b16 %v47
    %v204 = vunpack.c.h.b16 %v47
    %v205 = vunpack.c.l.b16 %v48
    %v206 = vunpack.c.h.b16 %v48
    %v207 = vunpack.c.l.b16 %v49
    %v208 = vunpack.c.h.b16 %v49
    %v209 = vunpack.c.l.b16 %v50
    %v210 = vunpack.c.h.b16 %v50
    %v211 = vunpack.c.l.b16 %v51
    %v212 = vunpack.c.h.b16 %v51
    %v213 = vunpack.c.l.b16 %v52
    %v214 = vunpack.c.h.b16 %v52
    %v215 = vunpack.c.l.b16 %v53
    %v216 = vunpack.c.h.b16 %v53
    %v217 = vunpack.c.l.b16 %v54
    %v218 = vunpack.c.h.b16 %v54
    %v219 = vunpack.c.l.b16 %v55
    %v220 = vunpack.c.h.b16 %v55
    %v221 = vunpack.c.l.b16 %v56
    %v222 = vunpack.c.h.b16 %v56
    %v223 = vunpack.c.l.b16 %v57
    %v224 = vunpack.c.h.b16 %v57
    %v225 = vunpack.c.l.b16 %v58
    %v226 = vunpack.c.h.b16 %v58
    %v227 = vunpack.c.l.b16 %v59
    %v228 = vunpack.c.h.b16 %v59
    %v229 = vunpack.c.l.b16 %v60
    %v230 = vunpack.c.h.b16 %v60
    %v231 = vunpack.c.l.b16 %v61
    %v232 = vunpack.c.h.b16 %v61
    %v233 = vunpack.c.l.b16 %v62
    %v234 = vunpack.c.h.b16 %v62
    %v235 = vunpack.c.l.b16 %v63
    %v236 = vunpack.c.h.b16 %v63
    %v237 = vunpack.c.l.b16 %v64
    %v238 = vunpack.c.h.b16 %v64
    %v239 = vunpack.c.l.b16 %v65
    %v240 = vunpack.c.h.b16 %v65
    %v241 = vunpack.c.l.b16 %v66
    %v242 = vunpack.c.h.b16 %v66
    %v243 = vunpack.c.l.b16 %v67
    %v244 = vunpack.c.h.b16 %v67
    %v245 = vunpack.c.l.b16 %v68
    %v246 = vunpack.c.h.b16 %v68
    %v247 = vunpack.c.l.b16 %v69
    %v248 = vunpack.c.h.b16 %v69
    %v249 = vunpack.c.l.b16 %v70
    %v250 = vunpack.c.h.b16 %v70
    %v251 = vunpack.c.l.b16 %v71
    %v252 = vunpack.c.h.b16 %v71
    %v253 = vunpack.c.l.b16 %v72
    %v254 = vunpack.c.h.b16 %v72
    %v255 = vunpack.c.l.b16 %v73
    %v256 = vunpack.c.h.b16 %v73
    %v257 = vunpack.c.l.b16 %v74
    %v258 = vunpack.c.h.b16 %v74
    %v259 = vunpack.c.l.b16 %v75
    %v260 = vunpack.c.h.b16 %v75
    %v261 = vunpack.c.l.b16 %v76
    %v262 = vunpack.c.h.b16 %v76
    %v263 = vunpack.c.l.b16 %v77
    %v264 = vunpack.c.h.b16 %v77
    %v265 = vunpack.c.l.b16 %v78
    %v266 = vunpack.c.h.b16 %v78
    %v267 = vunpack.c.l.b16 %v79
    %v268 = vunpack.c.h.b16 %v79
    %v269 = vunpack.c.l.b16 %v80
    %v270 = vunpack.c.h.b16 %v80
    %v271 = vunpack.c.l.b16 %v81
    %v272 = vunpack.c.h.b16 %v81
    %v273 = vunpack.c.l.b16 %v82
    %v274 = vunpack.c.h.b16 %v82
    %v275 = vunpack.c.l.b16 %v83
    %v276 = vunpack.c.h.b16 %v83
    %v277 = vunpack.c.l.b16 %v84
    %v278 = vunpack.c.h.b16 %v84
    %v279 = vunpack.c.l.b16 %v85
    %v280 = vunpack.c.h.b16 %v85
    %v281 = vunpack.c.l.b16 %v86
    %v282 = vunpack.c.h.b16 %v86
    %v283 = vunpack.c.l.b16 %v87
    %v284 = vunpack.c.h.b16 %v87
    %v285 = vunpack.c.l.b16 %v88
    %v286 = vunpack.c.h.b16 %v88
    %v287 = vunpack.c.l.b16 %v89
    %v288 = vunpack.c.h.b16 %v89
    %v289 = vunpack.c.l.b16 %v90
    %v290 = vunpack.c.h.b16 %v90
    %v291 = vunpack.c.l.b16 %v91
    %v292 = vunpack.c.h.b16 %v91
    %v293 = vunpack.c.l.b16 %v92
    %v294 = vunpack.c.h.b16 %v92
    %v295 = vunpack.c.l.b16 %v93
    %v296 = vunpack.c.h.b16 %v93
    %v297 = vunpack.c.l.b16 %v94
    %v298 = vunpack.c.h.b16 %v94
    %v299 = vunpack.c.l.b16 %v95
    %v300 = vunpack.c.h.b16 %v95
    %v301 = vunpack.c.l.b16 %v96
    %v302 = vunpack.c.h.b16 %v96
    %v303 = vunpack.c.l.b16 %v97
    %v304 = vunpack.c.h.b16 %v97
    %v305 = vunpack.c.l.b16 %v98
    %v306 = vunpack.c.h.b16 %v98
    %v307 = vunpack.c.l.b16 %v99
    %v308 = vunpack.c.h.b16 %v99
    %v309 = vunpack.c.l.b16 %v100
    %v310 = vunpack.c.h.b16 %v100
    %v311 = vunpack.c.l.b16 %v101
    %v312 = vunpack.c.h.b16 %v101
    %v313 = vunpack.c.l.b16 %v102
    %v314 = vunpack.c.h.b16 %v102
    %v315 = vunpack.c.l.b16 %v103
    %v316 = vunpack.c.h.b16 %v103
    %v317 = vunpack.c.l.b16 %v104
    %v318 = vunpack.c.h.b16 %v104
    %v319 = vpack.c.b16 %v195, %v191
    %v320 = vpack.c.b16 %v196, %v192
    %v321 = vpack.c.b16 %v197, %v193
    %v322 = vpack.c.b16 %v198, %v194
    %v323 = vpack.c.b16 %v203, %v199
    %v324 = vpack.c.b16 %v204, %v200
    %v325 = vpack.c.b16 %v205, %v201
    %v326 = vpack.c.b16 %v206, %v202
    %v327 = vpack.c.b16 %v211, %v207
    %v328 = vpack.c.b16 %v212, %v208
    %v329 = vpack.c.b16 %v213, %v209
    %v330 = vpack.c.b16 %v214, %v210
    %v331 = vpack.c.b16 %v219, %v215
    %v332 = vpack.c.b16 %v220, %v216
    %v333 = vpack.c.b16 %v221, %v217
    %v334 = vpack.c.b16 %v222, %v218
    %v335 = vpack.c.b16 %v227, %v223
    %v336 = vpack.c.b16 %v228, %v224
    %v337 = vpack.c.b16 %v229, %v225
    %v338 = vpack.c.b16 %v230, %v226
    %v339 = vpack.c.b16 %v235, %v231
    %v340 = vpack.c.b16 %v236, %v232
    %v341 = vpack.c.b16 %v237, %v233
    %v342 = vpack.c.b16 %v238, %v234
    %v343 = vpack.c.b16 %v243, %v239
    %v344 = vpack.c.b16 %v244, %v240
    %v345 = vpack.c.b16 %v245, %v241
    %v346 = vpack.c.b16 %v246, %v242
    %v347 = vpack.c.b16 %v251, %v247
    %v348 = vpack.c.b16 %v252, %v248
    %v349 = vpack.c.b16 %v253, %v249
    %v350 = vpack.c.b16 %v254, %v250
    %v351 = vpack.c.b16 %v259, %v255
    %v352 = vpack.c.b16 %v260, %v256
    %v353 = vpack.c.b16 %v261, %v257
    %v354 = vpack.c.b16 %v262, %v258
    %v355 = vpack.c.b16 %v267, %v263
    %v356 = vpack.c.b16 %v268, %v264
    %v357 = vpack.c.b16 %v269, %v265
    %v358 = vpack.c.b16 %v270, %v266
    %v359 = vpack.c.b16 %v275, %v271
    %v360 = vpack.c.b16 %v276, %v272
    %v361 = vpack.c.b16 %v277, %v273
    %v362 = vpack.c.b16 %v278, %v274
    %v363 = vpack.c.b16 %v283, %v279
    %v364 = vpack.c.b16 %v284, %v280
    %v365 = vpack.c.b16 %v285, %v281
    %v366 = vpack.c.b16 %v286, %v282
    %v367 = vpack.c.b16 %v291, %v287
    %v368 = vpack.c.b16 %v292, %v288
    %v369 = vpack.c.b16 %v293, %v289
    %v370 = vpack.c.b16 %v294, %v290
    %v371 = vpack.c.b16 %v299, %v295
    %v372 = vpack.c.b16 %v300, %v296
    %v373 = vpack.c.b16 %v301, %v297
    %v374 = vpack.c.b16 %v302, %v298
    %v375 = vpack.c.b16 %v307, %v303
    %v376 = vpack.c.b16 %v308, %v304
    %v377 = vpack.c.b16 %v309, %v305
    %v378 = vpack.c.b16 %v310, %v306
    %v379 = vpack.c.b16 %v315, %v311
    %v380 = vpack.c.b16 %v316, %v312
    %v381 = vpack.c.b16 %v317, %v313
    %v382 = vpack.c.b16 %v318, %v314
    %447 = vmatprep.subr.bf16.mxu0 %v348
    %448 = vmatpush1.bf16.msra.mxu0 %v347
    %449 = vmatprep.subr.bf16.mxu0 %v344
    %450 = vmatpush1.bf16.msra.mxu0 %v343
    %451 = vmatprep.subr.bf16.mxu0 %v340
    %452 = vmatpush1.bf16.msra.mxu0 %v339
    %453 = vmatprep.subr.bf16.mxu0 %v336
    %454 = vmatpush1.bf16.msra.mxu0 %v335
    %455 = vmatprep.subr.bf16.mxu0 %v332
    %456 = vmatpush1.bf16.msra.mxu0 %v331
    %457 = vmatprep.subr.bf16.mxu0 %v328
    %458 = vmatpush1.bf16.msra.mxu0 %v327
    %459 = vmatprep.subr.bf16.mxu0 %v324
    %460 = vmatpush1.bf16.msra.mxu0 %v323
    %461 = vmatprep.subr.bf16.mxu0 %v320
    %462 = vmatpush1.bf16.msra.mxu0 %v319
    %463 = vmatprep.subr.bf16.mxu0 %v380
    %464 = vmatpush2.bf16.msra.mxu0 %v379
    %465 = vmatprep.subr.bf16.mxu0 %v376
    %466 = vmatpush2.bf16.msra.mxu0 %v375
    %467 = vmatprep.subr.bf16.mxu0 %v372
    %468 = vmatpush2.bf16.msra.mxu0 %v371
    %469 = vmatprep.subr.bf16.mxu0 %v368
    %470 = vmatpush2.bf16.msra.mxu0 %v367
    %471 = vmatprep.subr.bf16.mxu0 %v364
    %472 = vmatpush2.bf16.msra.mxu0 %v363
    %473 = vmatprep.subr.bf16.mxu0 %v360
    %474 = vmatpush2.bf16.msra.mxu0 %v359
    %475 = vmatprep.subr.bf16.mxu0 %v356
    %476 = vmatpush2.bf16.msra.mxu0 %v355
    %477 = vmatprep.subr.bf16.mxu0 %v352
    %478 = vmatpush2.bf16.msra.mxu0 %v351
    %479 = vmatprep.mubr.bf16.mxu0 %v40
    %480 = vmatmul.mubr.bf16.gmra.mxu0 %v38
    %v481 = vpop.f32.mrf.mxu0
    %v482 = vadd.f32 %v110, %v481
    %v483 = vpop.f32.mrf.mxu0
    %v484 = vadd.f32 %v114, %v483
    %v485 = vpop.f32.mrf.mxu0
    %v486 = vpop.f32.mrf.mxu0
    %487 = vdwg.mxu0
    %488 = vmatprep.subr.bf16.mxu0 %v350
    %489 = vmatpush1.bf16.msra.mxu0 %v349
    %490 = vmatprep.subr.bf16.mxu0 %v346
    %491 = vmatpush1.bf16.msra.mxu0 %v345
    %492 = vmatprep.subr.bf16.mxu0 %v342
    %493 = vmatpush1.bf16.msra.mxu0 %v341
    %494 = vmatprep.subr.bf16.mxu0 %v338
    %495 = vmatpush1.bf16.msra.mxu0 %v337
    %496 = vmatprep.subr.bf16.mxu0 %v334
    %497 = vmatpush1.bf16.msra.mxu0 %v333
    %498 = vmatprep.subr.bf16.mxu0 %v330
    %499 = vmatpush1.bf16.msra.mxu0 %v329
    %500 = vmatprep.subr.bf16.mxu0 %v326
    %501 = vmatpush1.bf16.msra.mxu0 %v325
    %502 = vmatprep.subr.bf16.mxu0 %v322
    %503 = vmatpush1.bf16.msra.mxu0 %v321
    %504 = vmatprep.subr.bf16.mxu0 %v382
    %505 = vmatpush2.bf16.msra.mxu0 %v381
    %506 = vmatprep.subr.bf16.mxu0 %v378
    %507 = vmatpush2.bf16.msra.mxu0 %v377
    %508 = vmatprep.subr.bf16.mxu0 %v374
    %509 = vmatpush2.bf16.msra.mxu0 %v373
    %510 = vmatprep.subr.bf16.mxu0 %v370
    %511 = vmatpush2.bf16.msra.mxu0 %v369
    %512 = vmatprep.subr.bf16.mxu0 %v366
    %513 = vmatpush2.bf16.msra.mxu0 %v365
    %514 = vmatprep.subr.bf16.mxu0 %v362
    %515 = vmatpush2.bf16.msra.mxu0 %v361
    %516 = vmatprep.subr.bf16.mxu0 %v358
    %517 = vmatpush2.bf16.msra.mxu0 %v357
    %518 = vmatprep.subr.bf16.mxu0 %v354
    %519 = vmatpush2.bf16.msra.mxu0 %v353
    %520 = vmatprep.mubr.bf16.mxu0 %v40
    %521 = vmatmul.mubr.bf16.gmra.mxu0 %v38
    %v522 = vpop.f32.mrf.mxu0
    %v523 = vadd.f32 %v118, %v522
    %v524 = vpop.f32.mrf.mxu0
    %v525 = vadd.f32 %v122, %v524
    %v526 = vpop.f32.mrf.mxu0
    %v527 = vpop.f32.mrf.mxu0
    %528 = vdwg.mxu0
    %v529 = vxor.u32 %v482, 2147483648
    %v530 = vmul.f32 %v529, 1.442695
    %v531 = vpow.pop %v530
    %v532 = vadd.f32 %v531, 1.0
    %v533 = vrcp.pop %v532
    %v534 = vmul.f32 1.0, %v533
    %v535 = vxor.u32 %v484, 2147483648
    %v536 = vmul.f32 %v535, 1.442695
    %v537 = vpow.pop %v536
    %v538 = vadd.f32 %v537, 1.0
    %v539 = vrcp.pop %v538
    %v540 = vmul.f32 1.0, %v539
    %v541 = vtanh.pop %v523
    %v542 = vxor.u32 %v525, 2147483648
    %v543 = vmul.f32 %v542, 1.442695
    %v544 = vpow.pop %v543
    %v545 = vadd.f32 %v544, 1.0
    %v546 = vrcp.pop %v545
    %v547 = vmul.f32 1.0, %v546
    %v548 = vld [vmem:[%s2] sm:$0xff]
    %v549 = vmul.f32 %v540, %v548
    %v550 = vmul.f32 %v534, %v541
    %v551 = vadd.f32 %v549, %v550
    %v552 = vtanh.pop %v551
    %v553 = vmul.f32 %v547, %v552
    %554 = vst [vmem:[%s6] sm:$0xff] %v551
    %555 = vst [vmem:[%s5] sm:$0xff] %v553
    %v556 = vpack.c.bf16 %v553, %v553
    %557 = vst [vmem:[%s7] sm:$0xf] %v556
    // Predicated region
    $region26: #{decoder_forward.2} parent=1 // pred_check
      _
    $region27: #{decoder_forward.2} parent=1 // pred_check_branch
      %559 = sbr.rel (0) target = $region29
    $region28: #{decoder_forward.2} parent=1 // pred_region
      _
    $region29: #{decoder_forward.2} parent=1 // pred_fallthru
      _
    // Predicated region
    $region30: #{decoder_forward.2} parent=1 // pred_check
      _
    $region31: #{decoder_forward.2} parent=1 // pred_check_branch
      %561 = sbr.rel (0) target = $region33
    $region32: #{decoder_forward.2} parent=1 // pred_region
      _
    $region33: #{decoder_forward.2} parent=1 // pred_fallthru
      _
    // Predicated region
    $region34: #{decoder_forward.2} parent=1 // pred_check
      _
    $region35: #{decoder_forward.2} parent=1 // pred_check_branch
      %563 = sbr.rel (0) target = $region37
    $region36: #{decoder_forward.2} parent=1 // pred_region
      _
    $region37: #{decoder_forward.2} parent=1 // pred_fallthru
      _
    // Predicated region
    $region38: #{decoder_forward.2} parent=1 // pred_check
      _
    $region39: #{decoder_forward.2} parent=1 // pred_check_branch
      %565 = sbr.rel (0) target = $region41
    $region40: #{decoder_forward.2} parent=1 // pred_region
      _
    $region41: #{decoder_forward.2} parent=1 // pred_fallthru
      _
    // Predicated region
    $region42: #{decoder_forward.2} parent=1 // pred_check
      _
    $region43: #{decoder_forward.2} parent=1 // pred_check_branch
      %567 = sbr.rel (0) target = $region45
    $region44: #{decoder_forward.2} parent=1 // pred_region
      _
    $region45: #{decoder_forward.2} parent=1 // pred_fallthru
      _
    // Predicated region
    $region46: #{decoder_forward.2} parent=1 // pred_check
      _
    $region47: #{decoder_forward.2} parent=1 // pred_check_branch
      %569 = sbr.rel (0) target = $region49
    $region48: #{decoder_forward.2} parent=1 // pred_region
      _
    $region49: #{decoder_forward.2} parent=1 // pred_fallthru
      _
    %570 = vsyncpa [#allocation3], 1

// kernel: decoder_forward.3
$region0: #{decoder_forward.3}
  #allocation0 [shape = 'u32[]', space=smem, size = 0x4, offset = 0x4, fixed_abs, tag = 'smem constant byte address 0x4 - core index']
  #allocation1 [shape = 'u32[144,128]{1,0:T(1,128)}', space=vmem, size = 0x12000, scoped, tag = 'internal scratch']
  %s0 = inlined_call_operand.vmem [shape: bf16[8,128], index: 0, kind: input, shape index: {}]
  %s1 = inlined_call_operand.vmem [shape: bf16[128,512], index: 1, kind: input, shape index: {}]
  %s2 = inlined_call_operand.vmem [shape: f32[1,512], index: 2, kind: input, shape index: {}]
  %s3 = inlined_call_operand.vmem [shape: f32[8,512], index: 3, kind: output, shape index: {}]
  %s4 = sld [smem:[#allocation0]]
  $region22: #{decoder_forward.3} parent=0
    _
  %s6 = ssub.s32 1, %s4
  %s7 = scalar_select 0, %s6, %s4
  // Predicated region
  $region2: #{decoder_forward.3} parent=0 // pred_check
    _
  $region3: #{decoder_forward.3} parent=0 // pred_check_branch
    %9 = sbr.rel (0) target = $region5
  $region4: #{decoder_forward.3} parent=0 // pred_region
    _
  $region5: #{decoder_forward.3} parent=0 // pred_fallthru
    _
  // Predicated region
  $region6: #{decoder_forward.3} parent=0 // pred_check
    _
  $region7: #{decoder_forward.3} parent=0 // pred_check_branch
    %11 = sbr.rel (0) target = $region9
  $region8: #{decoder_forward.3} parent=0 // pred_region
    _
  $region9: #{decoder_forward.3} parent=0 // pred_fallthru
    _
  // Predicated region
  $region10: #{decoder_forward.3} parent=0 // pred_check
    _
  $region11: #{decoder_forward.3} parent=0 // pred_check_branch
    %13 = sbr.rel (0) target = $region13
  $region12: #{decoder_forward.3} parent=0 // pred_region
    _
  $region13: #{decoder_forward.3} parent=0 // pred_fallthru
    _
  %v15 = vld [vmem:[%s0] sm:$0xf]
  %v16 = vld [vmem:[%s1] sm:$0xff]
  %v17 = vld [vmem:[%s1 + $0x8] sm:$0xff]
  %v18 = vld [vmem:[%s1 + $0x10] sm:$0xff]
  %v19 = vld [vmem:[%s1 + $0x18] sm:$0xff]
  %v20 = vld [vmem:[%s1 + $0x20] sm:$0xff]
  %v21 = vld [vmem:[%s1 + $0x28] sm:$0xff]
  %v22 = vld [vmem:[%s1 + $0x30] sm:$0xff]
  %v23 = vld [vmem:[%s1 + $0x38] sm:$0xff]
  %v24 = vld [vmem:[%s1 + $0x40] sm:$0xff]
  %v25 = vld [vmem:[%s1 + $0x48] sm:$0xff]
  %v26 = vld [vmem:[%s1 + $0x50] sm:$0xff]
  %v27 = vld [vmem:[%s1 + $0x58] sm:$0xff]
  %v28 = vld [vmem:[%s1 + $0x60] sm:$0xff]
  %v29 = vld [vmem:[%s1 + $0x68] sm:$0xff]
  %v30 = vld [vmem:[%s1 + $0x70] sm:$0xff]
  %v31 = vld [vmem:[%s1 + $0x78] sm:$0xff]
  %v32 = vld [vmem:[%s1 + $0x80] sm:$0xff]
  %v33 = vld [vmem:[%s1 + $0x88] sm:$0xff]
  %v34 = vld [vmem:[%s1 + $0x90] sm:$0xff]
  %v35 = vld [vmem:[%s1 + $0x98] sm:$0xff]
  %v36 = vld [vmem:[%s1 + $0xa0] sm:$0xff]
  %v37 = vld [vmem:[%s1 + $0xa8] sm:$0xff]
  %v38 = vld [vmem:[%s1 + $0xb0] sm:$0xff]
  %v39 = vld [vmem:[%s1 + $0xb8] sm:$0xff]
  %v40 = vld [vmem:[%s1 + $0xc0] sm:$0xff]
  %v41 = vld [vmem:[%s1 + $0xc8] sm:$0xff]
  %v42 = vld [vmem:[%s1 + $0xd0] sm:$0xff]
  %v43 = vld [vmem:[%s1 + $0xd8] sm:$0xff]
  %v44 = vld [vmem:[%s1 + $0xe0] sm:$0xff]
  %v45 = vld [vmem:[%s1 + $0xe8] sm:$0xff]
  %v46 = vld [vmem:[%s1 + $0xf0] sm:$0xff]
  %v47 = vld [vmem:[%s1 + $0xf8] sm:$0xff]
  %v48 = vld [vmem:[%s2] sm:$0xf]
  %v50 = vlaneseq
  %v51 = vshrl.u32 %v50, 7
  %v52 = vsub.s32 0, %v51
  %v53 = vrot.slane %v48, %v52
  %v54 = vlaneseq
  %v55 = vshrl.u32 %v54, 7
  %v56 = vsub.s32 1, %v55
  %v57 = vrot.slane %v48, %v56
  %v58 = vlaneseq
  %v59 = vshrl.u32 %v58, 7
  %v60 = vsub.s32 2, %v59
  %v61 = vrot.slane %v48, %v60
  %v62 = vlaneseq
  %v63 = vshrl.u32 %v62, 7
  %v64 = vsub.s32 3, %v63
  %v65 = vrot.slane %v48, %v64
  %v102 = vunpack.c.l.b16 %v16
  %v103 = vunpack.c.h.b16 %v16
  %v104 = vunpack.c.l.b16 %v17
  %v105 = vunpack.c.h.b16 %v17
  %v106 = vunpack.c.l.b16 %v18
  %v107 = vunpack.c.h.b16 %v18
  %v108 = vunpack.c.l.b16 %v19
  %v109 = vunpack.c.h.b16 %v19
  %v110 = vunpack.c.l.b16 %v20
  %v111 = vunpack.c.h.b16 %v20
  %v112 = vunpack.c.l.b16 %v21
  %v113 = vunpack.c.h.b16 %v21
  %v114 = vunpack.c.l.b16 %v22
  %v115 = vunpack.c.h.b16 %v22
  %v116 = vunpack.c.l.b16 %v23
  %v117 = vunpack.c.h.b16 %v23
  %v118 = vunpack.c.l.b16 %v24
  %v119 = vunpack.c.h.b16 %v24
  %v120 = vunpack.c.l.b16 %v25
  %v121 = vunpack.c.h.b16 %v25
  %v122 = vunpack.c.l.b16 %v26
  %v123 = vunpack.c.h.b16 %v26
  %v124 = vunpack.c.l.b16 %v27
  %v125 = vunpack.c.h.b16 %v27
  %v126 = vunpack.c.l.b16 %v28
  %v127 = vunpack.c.h.b16 %v28
  %v128 = vunpack.c.l.b16 %v29
  %v129 = vunpack.c.h.b16 %v29
  %v130 = vunpack.c.l.b16 %v30
  %v131 = vunpack.c.h.b16 %v30
  %v132 = vunpack.c.l.b16 %v31
  %v133 = vunpack.c.h.b16 %v31
  %v134 = vunpack.c.l.b16 %v32
  %v135 = vunpack.c.h.b16 %v32
  %v136 = vunpack.c.l.b16 %v33
  %v137 = vunpack.c.h.b16 %v33
  %v138 = vunpack.c.l.b16 %v34
  %v139 = vunpack.c.h.b16 %v34
  %v140 = vunpack.c.l.b16 %v35
  %v141 = vunpack.c.h.b16 %v35
  %v142 = vunpack.c.l.b16 %v36
  %v143 = vunpack.c.h.b16 %v36
  %v144 = vunpack.c.l.b16 %v37
  %v145 = vunpack.c.h.b16 %v37
  %v146 = vunpack.c.l.b16 %v38
  %v147 = vunpack.c.h.b16 %v38
  %v148 = vunpack.c.l.b16 %v39
  %v149 = vunpack.c.h.b16 %v39
  %v150 = vunpack.c.l.b16 %v40
  %v151 = vunpack.c.h.b16 %v40
  %v152 = vunpack.c.l.b16 %v41
  %v153 = vunpack.c.h.b16 %v41
  %v154 = vunpack.c.l.b16 %v42
  %v155 = vunpack.c.h.b16 %v42
  %v156 = vunpack.c.l.b16 %v43
  %v157 = vunpack.c.h.b16 %v43
  %v158 = vunpack.c.l.b16 %v44
  %v159 = vunpack.c.h.b16 %v44
  %v160 = vunpack.c.l.b16 %v45
  %v161 = vunpack.c.h.b16 %v45
  %v162 = vunpack.c.l.b16 %v46
  %v163 = vunpack.c.h.b16 %v46
  %v164 = vunpack.c.l.b16 %v47
  %v165 = vunpack.c.h.b16 %v47
  %v166 = vpack.c.b16 %v106, %v102
  %v167 = vpack.c.b16 %v107, %v103
  %v168 = vpack.c.b16 %v108, %v104
  %v169 = vpack.c.b16 %v109, %v105
  %v170 = vpack.c.b16 %v114, %v110
  %v171 = vpack.c.b16 %v115, %v111
  %v172 = vpack.c.b16 %v116, %v112
  %v173 = vpack.c.b16 %v117, %v113
  %v174 = vpack.c.b16 %v122, %v118
  %v175 = vpack.c.b16 %v123, %v119
  %v176 = vpack.c.b16 %v124, %v120
  %v177 = vpack.c.b16 %v125, %v121
  %v178 = vpack.c.b16 %v130, %v126
  %v179 = vpack.c.b16 %v131, %v127
  %v180 = vpack.c.b16 %v132, %v128
  %v181 = vpack.c.b16 %v133, %v129
  %v182 = vpack.c.b16 %v138, %v134
  %v183 = vpack.c.b16 %v139, %v135
  %v184 = vpack.c.b16 %v140, %v136
  %v185 = vpack.c.b16 %v141, %v137
  %v186 = vpack.c.b16 %v146, %v142
  %v187 = vpack.c.b16 %v147, %v143
  %v188 = vpack.c.b16 %v148, %v144
  %v189 = vpack.c.b16 %v149, %v145
  %v190 = vpack.c.b16 %v154, %v150
  %v191 = vpack.c.b16 %v155, %v151
  %v192 = vpack.c.b16 %v156, %v152
  %v193 = vpack.c.b16 %v157, %v153
  %v194 = vpack.c.b16 %v162, %v158
  %v195 = vpack.c.b16 %v163, %v159
  %v196 = vpack.c.b16 %v164, %v160
  %v197 = vpack.c.b16 %v165, %v161
  %230 = vmatprep.subr.bf16.mxu0 %v195
  %231 = vmatpush1.bf16.msra.mxu0 %v194
  %232 = vmatprep.subr.bf16.mxu0 %v191
  %233 = vmatpush1.bf16.msra.mxu0 %v190
  %234 = vmatprep.subr.bf16.mxu0 %v187
  %235 = vmatpush1.bf16.msra.mxu0 %v186
  %236 = vmatprep.subr.bf16.mxu0 %v183
  %237 = vmatpush1.bf16.msra.mxu0 %v182
  %238 = vmatprep.subr.bf16.mxu0 %v179
  %239 = vmatpush1.bf16.msra.mxu0 %v178
  %240 = vmatprep.subr.bf16.mxu0 %v175
  %241 = vmatpush1.bf16.msra.mxu0 %v174
  %242 = vmatprep.subr.bf16.mxu0 %v171
  %243 = vmatpush1.bf16.msra.mxu0 %v170
  %244 = vmatprep.subr.bf16.mxu0 %v167
  %245 = vmatpush1.bf16.msra.mxu0 %v166
  %246 = vmatprep.subr.bf16.mxu0 0
  %247 = vmatpush2.bf16.msra.mxu0 0
  %248 = vmatprep.subr.bf16.mxu0 0
  %249 = vmatpush2.bf16.msra.mxu0 0
  %250 = vmatprep.subr.bf16.mxu0 0
  %251 = vmatpush2.bf16.msra.mxu0 0
  %252 = vmatprep.subr.bf16.mxu0 0
  %253 = vmatpush2.bf16.msra.mxu0 0
  %254 = vmatprep.subr.bf16.mxu0 0
  %255 = vmatpush2.bf16.msra.mxu0 0
  %256 = vmatprep.subr.bf16.mxu0 0
  %257 = vmatpush2.bf16.msra.mxu0 0
  %258 = vmatprep.subr.bf16.mxu0 0
  %259 = vmatpush2.bf16.msra.mxu0 0
  %260 = vmatprep.subr.bf16.mxu0 0
  %261 = vmatpush2.bf16.msra.mxu0 0
  %262 = vmatprep.mubr.bf16.mxu0 0
  %263 = vmatmul.mubr.bf16.gmra.mxu0 %v15
  %v264 = vpop.f32.mrf.mxu0
  %v265 = vadd.f32 %v53, %v264
  %v266 = vpop.f32.mrf.mxu0
  %v267 = vadd.f32 %v57, %v266
  %v268 = vpop.f32.mrf.mxu0
  %v269 = vpop.f32.mrf.mxu0
  %270 = vdwg.mxu0
  %271 = vmatprep.subr.bf16.mxu0 %v197
  %272 = vmatpush1.bf16.msra.mxu0 %v196
  %273 = vmatprep.subr.bf16.mxu0 %v193
  %274 = vmatpush1.bf16.msra.mxu0 %v192
  %275 = vmatprep.subr.bf16.mxu0 %v189
  %276 = vmatpush1.bf16.msra.mxu0 %v188
  %277 = vmatprep.subr.bf16.mxu0 %v185
  %278 = vmatpush1.bf16.msra.mxu0 %v184
  %279 = vmatprep.subr.bf16.mxu0 %v181
  %280 = vmatpush1.bf16.msra.mxu0 %v180
  %281 = vmatprep.subr.bf16.mxu0 %v177
  %282 = vmatpush1.bf16.msra.mxu0 %v176
  %283 = vmatprep.subr.bf16.mxu0 %v173
  %284 = vmatpush1.bf16.msra.mxu0 %v172
  %285 = vmatprep.subr.bf16.mxu0 %v169
  %286 = vmatpush1.bf16.msra.mxu0 %v168
  %287 = vmatprep.subr.bf16.mxu0 0
  %288 = vmatpush2.bf16.msra.mxu0 0
  %289 = vmatprep.subr.bf16.mxu0 0
  %290 = vmatpush2.bf16.msra.mxu0 0
  %291 = vmatprep.subr.bf16.mxu0 0
  %292 = vmatpush2.bf16.msra.mxu0 0
  %293 = vmatprep.subr.bf16.mxu0 0
  %294 = vmatpush2.bf16.msra.mxu0 0
  %295 = vmatprep.subr.bf16.mxu0 0
  %296 = vmatpush2.bf16.msra.mxu0 0
  %297 = vmatprep.subr.bf16.mxu0 0
  %298 = vmatpush2.bf16.msra.mxu0 0
  %299 = vmatprep.subr.bf16.mxu0 0
  %300 = vmatpush2.bf16.msra.mxu0 0
  %301 = vmatprep.subr.bf16.mxu0 0
  %302 = vmatpush2.bf16.msra.mxu0 0
  %303 = vmatprep.mubr.bf16.mxu0 0
  %304 = vmatmul.mubr.bf16.gmra.mxu0 %v15
  %v305 = vpop.f32.mrf.mxu0
  %v306 = vadd.f32 %v61, %v305
  %v307 = vpop.f32.mrf.mxu0
  %v308 = vadd.f32 %v65, %v307
  %v309 = vpop.f32.mrf.mxu0
  %v310 = vpop.f32.mrf.mxu0
  %311 = vdwg.mxu0
  %312 = vst [vmem:[%s3] sm:$0xff] %v265
  %313 = vst [vmem:[%s3 + $0x8] sm:$0xff] %v267
  %314 = vst [vmem:[%s3 + $0x10] sm:$0xff] %v306
  %315 = vst [vmem:[%s3 + $0x18] sm:$0xff] %v308
  // Predicated region
  $region14: #{decoder_forward.3} parent=0 // pred_check
    _
  $region15: #{decoder_forward.3} parent=0 // pred_check_branch
    %317 = sbr.rel (0) target = $region17
  $region16: #{decoder_forward.3} parent=0 // pred_region
    _
  $region17: #{decoder_forward.3} parent=0 // pred_fallthru
    _
  // Predicated region
  $region18: #{decoder_forward.3} parent=0 // pred_check
    _
  $region19: #{decoder_forward.3} parent=0 // pred_check_branch
    %319 = sbr.rel (0) target = $region21
  $region20: #{decoder_forward.3} parent=0 // pred_region
    _
  $region21: #{decoder_forward.3} parent=0 // pred_fallthru
    _

</llo_original>
